<compile_context>
chip_gen: v7x
topology: tpu7x:2x2x1
jax: 0.10.0
libtpu: 0.0.40
codegen_flags: <defaults>
</compile_context>

<pallas_src>
import functools

import jax
import jax.numpy as jnp
from jax.experimental import pallas as pl
from jax.experimental.pallas import tpu as pltpu

BN_EPS = 1e-5
LEAKY_SLOPE = 0.2


def decoder_block_kernel(x_ref, w_ref, gamma_ref, beta_ref, o_ref, *, tk):
    k = pl.program_id(1)

    # x may be resident in VMEM as the full (N, in_dim) block; slice the
    # current K chunk out of it.  If the block already has width tk (streamed
    # path, or tk == in_dim), read it whole.
    if x_ref.shape[1] == tk:
        xk = x_ref[...]
    else:
        start = pl.multiple_of(k * tk, tk)
        xk = x_ref[:, pl.ds(start, tk)]

    # Linear (bias omitted -- cancelled exactly by the batch-mean subtraction
    # below): bf16 operands on the MXU, f32 accumulation straight into o_ref.
    partial = jnp.dot(xk, w_ref[...], preferred_element_type=jnp.float32)

    @pl.when(k == 0)
    def _():
        o_ref[...] = partial

    @pl.when(k > 0)
    def _():
        o_ref[...] += partial

    @pl.when(k == pl.num_programs(1) - 1)
    def _():
        y = o_ref[...]                                        # (N, TN) f32
        # BatchNorm1d, training mode: biased batch statistics, single pass.
        mean = jnp.mean(y, axis=0, keepdims=True)             # (1, TN)
        mean_sq = jnp.mean(y * y, axis=0, keepdims=True)      # (1, TN)
        var = jnp.maximum(mean_sq - mean * mean, 0.0)         # biased variance
        # Fold the BN affine into a single per-feature scale/shift.
        scale = gamma_ref[...] * jax.lax.rsqrt(var + BN_EPS)  # (1, TN)
        shift = beta_ref[...] - scale * mean                  # (1, TN)
        z = y * scale + shift                                 # one FMA / element
        # LeakyReLU(0.2): max(z, 0.2*z) (slope < 1) -- mul + max, no select.
        o_ref[...] = jnp.maximum(z, LEAKY_SLOPE * z).astype(o_ref.dtype)


def _vmem_budget_bytes():
    """Per-chip VMEM we plan against (leaves headroom for compiler scratch)."""
    cap = 64 << 20  # conservative fallback = v7x physical VMEM per TensorCore
    try:
        cap = int(pltpu.get_tpu_info().vmem_capacity_bytes)
    except Exception:  # noqa: BLE001 - hardware query is best-effort
        pass
    # ~48 MiB on v7x (64 MiB phys), ~96 MiB on v5e/v6e (128 MiB phys).
    return min((cap * 3) // 4, 96 << 20)


def _tile_candidates(dim, max_tile):
    """Lane-dense (multiple-of-128) divisors of `dim`, descending."""
    cands = []
    t = (min(max_tile, dim) // 128) * 128
    while t >= 128:
        if dim % t == 0:
            cands.append(t)
        t -= 128
    return cands or [dim]  # small / odd extent: full dimension (always legal)


def _tn_candidates(out_dim):
    cands = _tile_candidates(out_dim, min(out_dim, 2048))
    # Prefer >= 2 feature tiles so the "parallel" axis can shard across the
    # two TensorCores on v7x (harmless on v5e/v6e).
    multi = [t for t in cands if out_dim // t >= 2]
    single = [t for t in cands if out_dim // t < 2]
    return (multi + single) or [out_dim]


def _tk_candidates(in_dim, x_resident):
    cands = _tile_candidates(in_dim, min(in_dim, 2048))
    if x_resident:
        # With x resident, tk == in_dim (single K step) minimizes per-step
        # overhead and W-DMA descriptor count.
        cands = [in_dim] + [c for c in cands if c != in_dim]
    return cands


def _footprint_bytes(n, in_dim, tn, tk, x_isz, w_isz, x_resident):
    x_blk = n * (in_dim if x_resident else tk) * x_isz
    w_blk = tk * tn * w_isz
    gb_blk = 2 * tn * 4           # gamma + beta tiles
    o_blk = n * tn * 4            # f32 output / accumulator block
    # Conservatively count 2x (double buffering) for every block.
    return 2 * (x_blk + w_blk + gb_blk + o_blk)


def _choose_config(n, in_dim, out_dim, x_isz, w_isz, budget):
    for x_resident in (True, False):          # residency first: kills x re-streaming
        for tn in _tn_candidates(out_dim):
            for tk in _tk_candidates(in_dim, x_resident):
                if _footprint_bytes(n, in_dim, tn, tk, x_isz, w_isz,
                                    x_resident) <= budget:
                    return tn, tk, x_resident
    raise NotImplementedError(
        "DecoderBlock batch does not fit VMEM with full-batch blocks; "
        "a batch-tiled BN variant is required.")


def decoder_block(x, w, b, gamma, beta, *, tn=None, tk=None):
    """x: (N, in_dim); w: (in_dim, out_dim) (pre-transposed Linear weight);
    b / gamma / beta: (1, out_dim).

    `b` is accepted for interface fidelity but unused: with training-mode
    BatchNorm the per-feature batch-mean subtraction cancels it exactly.
    """
    del b
    n, in_dim = x.shape
    out_dim = w.shape[1]
    x_isz = jnp.dtype(x.dtype).itemsize
    w_isz = jnp.dtype(w.dtype).itemsize

    budget = _vmem_budget_bytes()
    if tn is None or tk is None:
        tn_auto, tk_auto, _ = _choose_config(n, in_dim, out_dim, x_isz, w_isz,
                                             budget)
        tn = tn or tn_auto
        tk = tk or tk_auto
    assert out_dim % tn == 0 and in_dim % tk == 0

    # Keep x resident in VMEM whenever the footprint allows it.
    x_resident = _footprint_bytes(n, in_dim, tn, tk, x_isz, w_isz, True) <= budget
    footprint = _footprint_bytes(n, in_dim, tn, tk, x_isz, w_isz, x_resident)
    if footprint > budget:
        raise NotImplementedError(
            "TODO(synk): batch-tiled BN path needed -- full-batch blocks "
            f"({footprint} B) exceed the VMEM budget ({budget} B).")

    grid = (out_dim // tn, in_dim // tk)  # feature tiles (parallel), K last

    if x_resident:
        x_spec = pl.BlockSpec((n, in_dim), lambda j, k: (0, 0))  # fetched once
    else:
        x_spec = pl.BlockSpec((n, tk), lambda j, k: (0, k))      # streamed per k

    vmem_limit = min(budget, max(footprint + (8 << 20), 32 << 20))

    cost = pl.CostEstimate(
        flops=2 * n * in_dim * out_dim,
        transcendentals=out_dim,  # rsqrt per feature
        bytes_accessed=(n * in_dim * x_isz * (1 if x_resident else grid[0])
                        + in_dim * out_dim * w_isz
                        + 2 * out_dim * 4
                        + n * out_dim * 4))

    kernel = functools.partial(decoder_block_kernel, tk=tk)

    return pl.pallas_call(
        kernel,
        out_shape=jax.ShapeDtypeStruct((n, out_dim), jnp.float32),
        grid_spec=pltpu.PrefetchScalarGridSpec(
            num_scalar_prefetch=0,
            grid=grid,
            in_specs=[
                x_spec,                                        # x
                pl.BlockSpec((tk, tn), lambda j, k: (k, j)),   # W
                pl.BlockSpec((1, tn), lambda j, k: (0, j)),    # gamma
                pl.BlockSpec((1, tn), lambda j, k: (0, j)),    # beta
            ],
            out_specs=pl.BlockSpec((n, tn), lambda j, k: (0, j)),
        ),
        compiler_params=pltpu.CompilerParams(
            dimension_semantics=("parallel", "arbitrary"),
            vmem_limit_bytes=vmem_limit),
        cost_estimate=cost,
    )(x, w, gamma, beta)


def reference(x, w, b, gamma, beta):
    y = x.astype(jnp.float32) @ w.astype(jnp.float32) + b
    mean = jnp.mean(y, axis=0, keepdims=True)
    var = jnp.mean((y - mean) ** 2, axis=0, keepdims=True)
    z = gamma * (y - mean) / jnp.sqrt(var + BN_EPS) + beta
    return jnp.where(z >= 0, z, LEAKY_SLOPE * z)


if __name__ == "__main__":
    key = jax.random.PRNGKey(0)
    # Small but MXU/lane-aligned demo shapes; auto tile selection yields
    # tn=256 (2 parallel feature tiles) with x resident in VMEM.
    N, IN_DIM, OUT_DIM = 64, 256, 512

    k_x, k_w, k_b, k_g, k_be = jax.random.split(key, 5)
    bound = 1.0 / (IN_DIM ** 0.5)
    # bf16 MXU operands (f32 accumulation inside the kernel).
    x = jax.random.normal(k_x, (N, IN_DIM), dtype=jnp.float32).astype(jnp.bfloat16)
    w = jax.random.uniform(k_w, (IN_DIM, OUT_DIM), jnp.float32,
                           -bound, bound).astype(jnp.bfloat16)
    b = jax.random.uniform(k_b, (1, OUT_DIM), jnp.float32, -bound, bound)
    gamma = 1.0 + 0.1 * jax.random.normal(k_g, (1, OUT_DIM), dtype=jnp.float32)
    beta = 0.1 * jax.random.normal(k_be, (1, OUT_DIM), dtype=jnp.float32)

    out = jax.block_until_ready(decoder_block(x, w, b, gamma, beta))

    ref = reference(x, w, b, gamma, beta)
    assert out.shape == (N, OUT_DIM)
    max_err = float(jnp.max(jnp.abs(out - ref)))
    assert jnp.allclose(out, ref, atol=5e-4, rtol=5e-4), f"mismatch: {max_err}"
    print("KERNEL_OK")
</pallas_src>

<mosaic_0001>
module attributes {stable_mosaic.version = 11 : i64} {
  func.func @decoder_block_kernel(%arg0: i32, %arg1: i32, %arg2: memref<64x256xbf16, #tpu.memory_space<vmem>>, %arg3: memref<256x256xbf16, #tpu.memory_space<vmem>>, %arg4: memref<1x256xf32, #tpu.memory_space<vmem>>, %arg5: memref<1x256xf32, #tpu.memory_space<vmem>>, %arg6: memref<64x256xf32, #tpu.memory_space<vmem>>) attributes {dimension_semantics = [#tpu.dimension_semantics<parallel>, #tpu.dimension_semantics<arbitrary>], iteration_bounds = array<i64: 2, 1>, scalar_prefetch = 0 : i64, scratch_operands = 0 : i64, tpu.core_type = #tpu.core_type<tc>, window_params = [{pipeline_mode = #tpu.pipeline_mode<synchronous>, transform_indices = @transform_0, window_bounds = array<i64: 64, 256>}, {transform_indices = @transform_1, window_bounds = array<i64: 256, 256>}, {transform_indices = @transform_2, window_bounds = array<i64: 1, 256>}, {transform_indices = @transform_3, window_bounds = array<i64: 1, 256>}, {transform_indices = @transform_4, window_bounds = array<i64: 64, 256>}]} {
    %c0 = arith.constant 0 : index
    %c0_0 = arith.constant 0 : index
    %0 = vector.load %arg2[%c0, %c0_0] : memref<64x256xbf16, #tpu.memory_space<vmem>>, vector<64x256xbf16>
    %c0_1 = arith.constant 0 : index
    %c0_2 = arith.constant 0 : index
    %1 = vector.load %arg3[%c0_1, %c0_2] : memref<256x256xbf16, #tpu.memory_space<vmem>>, vector<256x256xbf16>
    %cst = arith.constant dense<0.000000e+00> : vector<64x256xf32>
    %2 = tpu.matmul %0, %1, %cst {dimension_numbers = #tpu.dot_dimension_numbers<[1], [0], [0], [1], [0, 0, 1, 1], [], []>} : vector<64x256xbf16>, vector<256x256xbf16>, vector<64x256xf32> -> vector<64x256xf32>
    %c0_i32 = arith.constant 0 : i32
    %3 = arith.cmpi eq, %arg1, %c0_i32 : i32
    %4 = arith.extui %3 : i1 to i32
    %c0_i32_3 = arith.constant 0 : i32
    %5 = arith.cmpi ne, %4, %c0_i32_3 : i32
    scf.if %5 {
      %c0_8 = arith.constant 0 : index
      %c0_9 = arith.constant 0 : index
      %12 = vector.load %arg6[%c0_8, %c0_9] : memref<64x256xf32, #tpu.memory_space<vmem>>, vector<64x256xf32>
      tpu.vector_store %arg6[%c0_8, %c0_9], %2 {strides = array<i32>} : memref<64x256xf32, #tpu.memory_space<vmem>>, vector<64x256xf32>,
    } else {
    }
    %c0_i32_4 = arith.constant 0 : i32
    %6 = arith.cmpi sgt, %arg1, %c0_i32_4 : i32
    %7 = arith.extui %6 : i1 to i32
    %c0_i32_5 = arith.constant 0 : i32
    %8 = arith.cmpi ne, %7, %c0_i32_5 : i32
    scf.if %8 {
      %c0_8 = arith.constant 0 : index
      %c0_9 = arith.constant 0 : index
      %12 = vector.load %arg6[%c0_8, %c0_9] : memref<64x256xf32, #tpu.memory_space<vmem>>, vector<64x256xf32>
      %13 = arith.addf %12, %2 : vector<64x256xf32>
      %c0_10 = arith.constant 0 : index
      %c0_11 = arith.constant 0 : index
      %14 = vector.load %arg6[%c0_10, %c0_11] : memref<64x256xf32, #tpu.memory_space<vmem>>, vector<64x256xf32>
      tpu.vector_store %arg6[%c0_10, %c0_11], %13 {strides = array<i32>} : memref<64x256xf32, #tpu.memory_space<vmem>>, vector<64x256xf32>,
    } else {
    }
    %c0_i32_6 = arith.constant 0 : i32
    %9 = arith.cmpi eq, %arg1, %c0_i32_6 : i32
    %10 = arith.extui %9 : i1 to i32
    %c0_i32_7 = arith.constant 0 : i32
    %11 = arith.cmpi ne, %10, %c0_i32_7 : i32
    scf.if %11 {
      %c0_8 = arith.constant 0 : index
      %c0_9 = arith.constant 0 : index
      %12 = vector.load %arg6[%c0_8, %c0_9] : memref<64x256xf32, #tpu.memory_space<vmem>>, vector<64x256xf32>
      %cst_10 = arith.constant dense<0.000000e+00> : vector<256xf32>
      %13 = vector.multi_reduction <add>, %12, %cst_10 [0] : vector<64x256xf32> to vector<256xf32>
      %14 = vector.shape_cast %13 : vector<256xf32> to vector<1x256xf32>
      %cst_11 = arith.constant 6.400000e+01 : f32
      %15 = vector.broadcast %cst_11 : f32 to vector<1x256xf32>
      %16 = arith.divf %14, %15 : vector<1x256xf32>
      %17 = arith.mulf %12, %12 : vector<64x256xf32>
      %cst_12 = arith.constant dense<0.000000e+00> : vector<256xf32>
      %18 = vector.multi_reduction <add>, %17, %cst_12 [0] : vector<64x256xf32> to vector<256xf32>
      %19 = vector.shape_cast %18 : vector<256xf32> to vector<1x256xf32>
      %cst_13 = arith.constant 6.400000e+01 : f32
      %20 = vector.broadcast %cst_13 : f32 to vector<1x256xf32>
      %21 = arith.divf %19, %20 : vector<1x256xf32>
      %22 = arith.mulf %16, %16 : vector<1x256xf32>
      %23 = arith.subf %21, %22 : vector<1x256xf32>
      %cst_14 = arith.constant 0.000000e+00 : f32
      %24 = vector.broadcast %cst_14 : f32 to vector<1x256xf32>
      %25 = arith.maximumf %23, %24 : vector<1x256xf32>
      %c0_15 = arith.constant 0 : index
      %c0_16 = arith.constant 0 : index
      %26 = vector.load %arg4[%c0_15, %c0_16] : memref<1x256xf32, #tpu.memory_space<vmem>>, vector<1x256xf32>
      %cst_17 = arith.constant 9.99999974E-6 : f32
      %27 = vector.broadcast %cst_17 : f32 to vector<1x256xf32>
      %28 = arith.addf %25, %27 : vector<1x256xf32>
      %29 = math.rsqrt %28 : vector<1x256xf32>
      %30 = arith.mulf %26, %29 : vector<1x256xf32>
      %c0_18 = arith.constant 0 : index
      %c0_19 = arith.constant 0 : index
      %31 = vector.load %arg5[%c0_18, %c0_19] : memref<1x256xf32, #tpu.memory_space<vmem>>, vector<1x256xf32>
      %32 = arith.mulf %30, %16 : vector<1x256xf32>
      %33 = arith.subf %31, %32 : vector<1x256xf32>
      %34 = vector.broadcast %30 : vector<1x256xf32> to vector<64x256xf32>
      %35 = arith.mulf %12, %34 : vector<64x256xf32>
      %36 = vector.broadcast %33 : vector<1x256xf32> to vector<64x256xf32>
      %37 = arith.addf %35, %36 : vector<64x256xf32>
      %cst_20 = arith.constant 2.000000e-01 : f32
      %38 = vector.broadcast %cst_20 : f32 to vector<64x256xf32>
      %39 = arith.mulf %38, %37 : vector<64x256xf32>
      %40 = arith.maximumf %37, %39 : vector<64x256xf32>
      %c0_21 = arith.constant 0 : index
      %c0_22 = arith.constant 0 : index
      %41 = vector.load %arg6[%c0_21, %c0_22] : memref<64x256xf32, #tpu.memory_space<vmem>>, vector<64x256xf32>
      tpu.vector_store %arg6[%c0_21, %c0_22], %40 {strides = array<i32>} : memref<64x256xf32, #tpu.memory_space<vmem>>, vector<64x256xf32>,
    } else {
    }
    return
  }
  func.func @transform_0(%arg0: i32, %arg1: i32) -> (i32, i32) {
    %c0_i32 = arith.constant 0 : i32
    %c0_i32_0 = arith.constant 0 : i32
    %c0_i32_1 = arith.constant 0 : i32
    return %c0_i32, %c0_i32_0 : i32, i32
  }
  func.func @transform_1(%arg0: i32, %arg1: i32) -> (i32, i32) {
    %c0_i32 = arith.constant 0 : i32
    return %arg1, %arg0 : i32, i32
  }
  func.func @transform_2(%arg0: i32, %arg1: i32) -> (i32, i32) {
    %c0_i32 = arith.constant 0 : i32
    %c0_i32_0 = arith.constant 0 : i32
    return %c0_i32, %arg0 : i32, i32
  }
  func.func @transform_3(%arg0: i32, %arg1: i32) -> (i32, i32) {
    %c0_i32 = arith.constant 0 : i32
    %c0_i32_0 = arith.constant 0 : i32
    return %c0_i32, %arg0 : i32, i32
  }
  func.func @transform_4(%arg0: i32, %arg1: i32) -> (i32, i32) {
    %c0_i32 = arith.constant 0 : i32
    %c0_i32_0 = arith.constant 0 : i32
    return %c0_i32, %arg0 : i32, i32
  }
}

</mosaic_0001>

<llo_original>
// kernel: tpu_custom_call.1
$region0: #{tpu_custom_call.1}
  #allocation0 [shape = 'u32[]', space=smem, size = 0x4, offset = 0x4, fixed_abs, tag = 'smem constant byte address 0x4 - core index']
  #allocation1 [shape = 'u32[144,128]{1,0:T(1,128)}', space=vmem, size = 0x12000, scoped, tag = 'internal scratch']
  %s0 = inlined_call_operand.hbm [shape: bf16[64,256], index: 0, kind: input, shape index: {}]
  %s1 = inlined_call_operand.hbm [shape: bf16[256,512], index: 1, kind: input, shape index: {}]
  %s2 = inlined_call_operand.vmem [shape: f32[1,512], index: 2, kind: input, shape index: {}]
  %s3 = inlined_call_operand.vmem [shape: f32[1,512], index: 3, kind: input, shape index: {}]
  %s4 = inlined_call_operand.hbm [shape: f32[64,512], index: 4, kind: output, shape index: {}]
  %s5 = sld [smem:[#allocation0]]
  $region69: #{tpu_custom_call.1} parent=0
    _
  %s7 = ssub.s32 1, %s5
  %s8 = scalar_select 0, %s7, %s5
  $region1: #{tpu_custom_call.1} parent=0
    #allocation2 [shape = 'u8[32768]{0}', space=vmem, size = 0x8000, scoped, tag = 'input window, operand 0, single buffered']
    #allocation3 [shape = 's32[2]{0}', space=sflag, size = 0x8, scoped, tag = 'scoped memory for tpu_custom_call.1']
    #allocation4 [shape = 's32[2]{0}', space=sflag, size = 0x8, scoped, tag = 'scoped memory for tpu_custom_call.1']
    #allocation5 [shape = 'u8[262144]{0}', space=vmem, size = 0x40000, scoped, tag = 'input window, operand 1']
    #allocation6 [shape = 's32[2]{0}', space=sflag, size = 0x8, scoped, tag = 'scoped memory for tpu_custom_call.1']
    #allocation7 [shape = 'u8[131072]{0}', space=vmem, size = 0x20000, scoped, tag = 'output window, operand 0']
    %9 = vsyncpa [#allocation3], 0
    %10 = vsyncpa [#allocation6], 0
    %s11 = scalar_lea.sflag [#allocation6], 1
    %12 = vsyncpa %s11, 0
    %13 = vsyncpa [#allocation4], 0
    %s14 = scalar_lea.sflag [#allocation4], 1
    %15 = vsyncpa %s14, 0
    loop: start=0, step=1, limit=4
    $region2: #{tpu_custom_call.1} parent=1 // loop_pre_header
      _
    $region3: #{tpu_custom_call.1} parent=1 // loop_header
      %s17 = sphi 0, %s21
      %p18 = scmp.ge.s32.totalorder %s17, 4
      %s24 = sphi 0, %s36
      %s25 = sphi 0, %s32
      %s26 = sphi 0, %s24
      %s27 = sphi 0, %s25
      %s28 = sphi 0, %s26
      %s29 = sphi 0, %s27
      %s37 = sphi 0, %s37
      %s39 = sphi 0, %s37
      %s40 = sphi 0, %s39
      %s54 = sphi 0, %s40
      %s62 = sphi 0, %s64
      %s65 = sphi 0, %s62
      %s66 = sphi 0, %s65
      %s82 = sphi 0, %s66
      %s88 = sphi 0, %s90
      %s91 = sphi 0, %s88
      %s92 = sphi 0, %s91
      %s108 = sphi 0, %s92
      %s114 = sphi 0, %s116
      %s117 = sphi 0, %s114
      %s118 = sphi 0, %s117
      %s134 = sphi 0, %s118
      %s140 = sphi 0, %s142
      %s143 = sphi 0, %s140
      %s144 = sphi 0, %s143
      %s160 = sphi 0, %s144
    $region4: #{tpu_custom_call.1} parent=1 // loop_header_branch
      %20 = sbr.rel (%p18) target = $region8
    $region5: #{tpu_custom_call.1} parent=1 // loop_body
      %s22 = ssub.s32 %s17, 1
      %s23 = ssub.s32 %s17, 2
      %s30 = sadd.s32 1, %s25
      %p31 = scmp.ge.s32.totalorder %s30, 1
      %s32 = scalar_select %p31, 0, %s30
      %s33 = sadd.s32 1, %s24
      %s34 = scalar_select %p31, %s33, %s24
      %p35 = scmp.ge.s32.totalorder %s34, 2
      %s36 = scalar_select %p35, 0, %s34
      %s38 = sadd.s32 %s37, 1
      %p41 = scmp.eq.s32.totalorder %s17, 1
      %p42 = scmp.ne.s32.totalorder %s37, %s39
      %p43 = scmp.eq.s32.totalorder %s17, 0
      %p44 = por %p42, %p43
      %p45 = scmp.ne.s32.totalorder %s37, %s39
      %p46 = scmp.eq.s32.totalorder %s22, 1
      %p47 = por %p45, %p46
      %p48 = scmp.ne.s32.totalorder %s39, %s40
      %p49 = scmp.eq.s32.totalorder %s22, 0
      %p50 = por %p48, %p49
      %p51 = scmp.ne.s32.totalorder %s39, %s40
      %p52 = scmp.eq.s32.totalorder %s23, 1
      %p53 = por %p51, %p52
      %p55 = scmp.ne.s32.totalorder %s40, %s54
      %p56 = scmp.eq.s32.totalorder %s23, 0
      %p57 = por %p55, %p56
      %s58 = ssub.s32 %s25, %s32
      %s59 = ssub.s32 %s24, %s36
      %s60 = sor.u32 %s58, %s59
      %p61 = scmp.eq.s32.totalorder %s60, 0
      %s63 = sadd.s32 %s62, 1
      %s64 = scalar_select %p61, %s62, %s63
      %p67 = pneg %p61
      %p68 = scmp.eq.s32.totalorder %s17, 1
      %p69 = por %p67, %p68
      %p70 = scmp.ne.s32.totalorder %s62, %s65
      %p71 = scmp.eq.s32.totalorder %s17, 0
      %p72 = por %p70, %p71
      %p73 = scmp.ne.s32.totalorder %s62, %s65
      %p74 = scmp.eq.s32.totalorder %s22, 1
      %p75 = por %p73, %p74
      %p76 = scmp.ne.s32.totalorder %s65, %s66
      %p77 = scmp.eq.s32.totalorder %s22, 0
      %p78 = por %p76, %p77
      %p79 = scmp.ne.s32.totalorder %s65, %s66
      %p80 = scmp.eq.s32.totalorder %s23, 1
      %p81 = por %p79, %p80
      %p83 = scmp.ne.s32.totalorder %s66, %s82
      %p84 = scmp.eq.s32.totalorder %s23, 0
      %p85 = por %p83, %p84
      %s86 = ssub.s32 %s24, %s36
      %p87 = scmp.eq.s32.totalorder %s86, 0
      %s89 = sadd.s32 %s88, 1
      %s90 = scalar_select %p87, %s88, %s89
      %p93 = pneg %p87
      %p94 = scmp.eq.s32.totalorder %s17, 1
      %p95 = por %p93, %p94
      %p96 = scmp.ne.s32.totalorder %s88, %s91
      %p97 = scmp.eq.s32.totalorder %s17, 0
      %p98 = por %p96, %p97
      %p99 = scmp.ne.s32.totalorder %s88, %s91
      %p100 = scmp.eq.s32.totalorder %s22, 1
      %p101 = por %p99, %p100
      %p102 = scmp.ne.s32.totalorder %s91, %s92
      %p103 = scmp.eq.s32.totalorder %s22, 0
      %p104 = por %p102, %p103
      %p105 = scmp.ne.s32.totalorder %s91, %s92
      %p106 = scmp.eq.s32.totalorder %s23, 1
      %p107 = por %p105, %p106
      %p109 = scmp.ne.s32.totalorder %s92, %s108
      %p110 = scmp.eq.s32.totalorder %s23, 0
      %p111 = por %p109, %p110
      %s112 = ssub.s32 %s24, %s36
      %p113 = scmp.eq.s32.totalorder %s112, 0
      %s115 = sadd.s32 %s114, 1
      %s116 = scalar_select %p113, %s114, %s115
      %p119 = pneg %p113
      %p120 = scmp.eq.s32.totalorder %s17, 1
      %p121 = por %p119, %p120
      %p122 = scmp.ne.s32.totalorder %s114, %s117
      %p123 = scmp.eq.s32.totalorder %s17, 0
      %p124 = por %p122, %p123
      %p125 = scmp.ne.s32.totalorder %s114, %s117
      %p126 = scmp.eq.s32.totalorder %s22, 1
      %p127 = por %p125, %p126
      %p128 = scmp.ne.s32.totalorder %s117, %s118
      %p129 = scmp.eq.s32.totalorder %s22, 0
      %p130 = por %p128, %p129
      %p131 = scmp.ne.s32.totalorder %s117, %s118
      %p132 = scmp.eq.s32.totalorder %s23, 1
      %p133 = por %p131, %p132
      %p135 = scmp.ne.s32.totalorder %s118, %s134
      %p136 = scmp.eq.s32.totalorder %s23, 0
      %p137 = por %p135, %p136
      %s138 = ssub.s32 %s24, %s36
      %p139 = scmp.eq.s32.totalorder %s138, 0
      %s141 = sadd.s32 %s140, 1
      %s142 = scalar_select %p139, %s140, %s141
      %p145 = pneg %p139
      %p146 = scmp.eq.s32.totalorder %s17, 1
      %p147 = por %p145, %p146
      %p148 = scmp.ne.s32.totalorder %s140, %s143
      %p149 = scmp.eq.s32.totalorder %s17, 0
      %p150 = por %p148, %p149
      %p151 = scmp.ne.s32.totalorder %s140, %s143
      %p152 = scmp.eq.s32.totalorder %s22, 1
      %p153 = por %p151, %p152
      %p154 = scmp.ne.s32.totalorder %s143, %s144
      %p155 = scmp.eq.s32.totalorder %s22, 0
      %p156 = por %p154, %p155
      %p157 = scmp.ne.s32.totalorder %s143, %s144
      %p158 = scmp.eq.s32.totalorder %s23, 1
      %p159 = por %p157, %p158
      %p161 = scmp.ne.s32.totalorder %s144, %s160
      %p162 = scmp.eq.s32.totalorder %s23, 0
      %p163 = por %p161, %p162
      %p164 = scmp.le.s32.totalorder 1, %s17
      %p165 = scmp.lt.s32.totalorder %s17, 3
      %p166 = pnand %p164, %p165
      %p167 = pneg %p166
      // Predicated region
      $region9: #{tpu_custom_call.1} parent=5 // pred_check
        _
      $region10: #{tpu_custom_call.1} parent=5 // pred_check_branch
        %169 = sbr.rel (%p166) target = $region12
      $region11: #{tpu_custom_call.1} parent=5 // pred_region
        %s170 = ssub.s32 %s17, 1
        // Predicated region
        $region13: #{tpu_custom_call.1} parent=11 // pred_check
          %p171 = pneg %p50
        $region14: #{tpu_custom_call.1} parent=11 // pred_check_branch
          %173 = sbr.rel (%p171) target = $region16
        $region15: #{tpu_custom_call.1} parent=11 // pred_region
          %s175 = ssub.s32 1024, 1024
          %176 = vsyncadd [#allocation3], %s175
          %s177 = sshll.u32 [#allocation2], 4
          %s178 = int_to_ptr.vmem [resolvable:$true] %s177
          %183 = dma.hbm_to_vmem [thread:$0]  %s0, 1024, %s178, [#allocation3], 128, 128, 8
        $region16: #{tpu_custom_call.1} parent=11 // pred_fallthru
          _
      $region12: #{tpu_custom_call.1} parent=5 // pred_fallthru
        _
      %p184 = scmp.lt.s32.totalorder %s17, 2
      // Predicated region
      $region17: #{tpu_custom_call.1} parent=5 // pred_check
        %p185 = pneg %p184
      $region18: #{tpu_custom_call.1} parent=5 // pred_check_branch
        %187 = sbr.rel (%p185) target = $region20
      $region19: #{tpu_custom_call.1} parent=5 // pred_region
        // Predicated region
        $region21: #{tpu_custom_call.1} parent=19 // pred_check
          %p188 = pneg %p72
        $region22: #{tpu_custom_call.1} parent=19 // pred_check_branch
          %190 = sbr.rel (%p188) target = $region24
        $region23: #{tpu_custom_call.1} parent=19 // pred_region
          %s191 = sand.u32 %s62, 1
          %s192 = scalar_lea.sflag [#allocation6], %s191
          %s193 = sand.u32 %s62, 1
          %s194 = smul.addr %s193, 256
          %s195 = scalar_lea.vmem [#allocation5], %s194
          %s196 = smul.u32 32, %s25
          %s197 = smul.u32 2, %s24
          %s199 = ssub.s32 4096, 4096
          %200 = vsyncadd %s192, %s199
          %s201 = smul.addr %s196, 4
          %s202 = sadd.s32 %s197, %s201
          %s203 = smul.addr %s202, 64
          %s204 = scalar_lea.hbm %s1, %s203
          %s205 = sshll.u32 %s195, 4
          %s206 = int_to_ptr.vmem [resolvable:$true] %s205
          %211 = dma.hbm_to_vmem [thread:$0]  %s204, 4096, %s206, %s192, 256, 128, 8
        $region24: #{tpu_custom_call.1} parent=19 // pred_fallthru
          _
        // Predicated region
        $region25: #{tpu_custom_call.1} parent=19 // pred_check
          %p212 = pneg %p98
        $region26: #{tpu_custom_call.1} parent=19 // pred_check_branch
          %214 = sbr.rel (%p212) target = $region28
        $region27: #{tpu_custom_call.1} parent=19 // pred_region
          %s215 = smul.u32 2, %s24
          %p216 = scmp.lt.s32.totalorder %s215, 3
          %s217 = scalar_select %p216, %s215, 3
          %s218 = scalar_lea.vmem %s2, %s217
          %s219 = smul.u32 2, %s24
        $region28: #{tpu_custom_call.1} parent=19 // pred_fallthru
          _
        // Predicated region
        $region29: #{tpu_custom_call.1} parent=19 // pred_check
          %p220 = pneg %p124
        $region30: #{tpu_custom_call.1} parent=19 // pred_check_branch
          %222 = sbr.rel (%p220) target = $region32
        $region31: #{tpu_custom_call.1} parent=19 // pred_region
          %s223 = smul.u32 2, %s24
          %p224 = scmp.lt.s32.totalorder %s223, 3
          %s225 = scalar_select %p224, %s223, 3
          %s226 = scalar_lea.vmem %s3, %s225
          %s227 = smul.u32 2, %s24
        $region32: #{tpu_custom_call.1} parent=19 // pred_fallthru
          _
      $region20: #{tpu_custom_call.1} parent=5 // pred_fallthru
        _
      %p228 = scmp.le.s32.totalorder 1, %s17
      %p229 = scmp.lt.s32.totalorder %s17, 3
      %p230 = pnand %p228, %p229
      %p231 = pneg %p230
      // Predicated region
      $region33: #{tpu_custom_call.1} parent=5 // pred_check
        _
      $region34: #{tpu_custom_call.1} parent=5 // pred_check_branch
        %233 = sbr.rel (%p230) target = $region36
      $region35: #{tpu_custom_call.1} parent=5 // pred_region
        %s234 = ssub.s32 %s17, 1
        // Predicated region
        $region37: #{tpu_custom_call.1} parent=35 // pred_check
          %p235 = pneg %p50
        $region38: #{tpu_custom_call.1} parent=35 // pred_check_branch
          %237 = sbr.rel (%p235) target = $region40
        $region39: #{tpu_custom_call.1} parent=35 // pred_region
          %238 = dma.done [#allocation3], 1024
        $region40: #{tpu_custom_call.1} parent=35 // pred_fallthru
          _
        %s239 = sand.u32 %s65, 1
        %s240 = scalar_lea.sflag [#allocation6], %s239
        %s241 = sand.u32 %s65, 1
        %s242 = smul.addr %s241, 256
        %s243 = scalar_lea.vmem [#allocation5], %s242
        // Predicated region
        $region41: #{tpu_custom_call.1} parent=35 // pred_check
          %p244 = pneg %p78
        $region42: #{tpu_custom_call.1} parent=35 // pred_check_branch
          %246 = sbr.rel (%p244) target = $region44
        $region43: #{tpu_custom_call.1} parent=35 // pred_region
          %247 = dma.done %s240, 4096
        $region44: #{tpu_custom_call.1} parent=35 // pred_fallthru
          _
        %p248 = pneg %p50
        %p249 = pneg %p47
        %s250 = sand.u32 %s65, 1
        %s251 = scalar_lea.sflag [#allocation6], %s250
        %s252 = sand.u32 %s65, 1
        %s253 = smul.addr %s252, 256
        %s254 = scalar_lea.vmem [#allocation5], %s253
        %p255 = pneg %p78
        %p256 = pneg %p75
        %s257 = smul.u32 2, %s26
        %p258 = scmp.lt.s32.totalorder %s257, 3
        %s259 = scalar_select %p258, %s257, 3
        %s260 = scalar_lea.vmem %s2, %s259
        %p261 = pneg %p104
        %p262 = pneg %p101
        %s263 = smul.u32 2, %s26
        %p264 = scmp.lt.s32.totalorder %s263, 3
        %s265 = scalar_select %p264, %s263, 3
        %s266 = scalar_lea.vmem %s3, %s265
        %p267 = pneg %p130
        %p268 = pneg %p127
        %p269 = pneg %p156
        %p270 = pneg %p153
        %s271 = sand.u32 %s143, 1
        %s272 = scalar_lea.sflag [#allocation4], %s271
        %s273 = sand.u32 %s143, 1
        %s274 = smul.addr %s273, 128
        %s275 = scalar_lea.vmem [#allocation7], %s274
        %s276 = smul.u32 32, %s27
        %s277 = smul.u32 2, %s26
        %s278 = smul.u32 2, %s26
        %p279 = scmp.lt.s32.totalorder %s278, 3
        %s280 = scalar_select %p279, %s278, 3
        %s281 = scalar_lea.vmem %s2, %s280
        %s282 = smul.u32 2, %s26
        %s283 = smul.u32 2, %s26
        %p284 = scmp.lt.s32.totalorder %s283, 3
        %s285 = scalar_select %p284, %s283, 3
        %s286 = scalar_lea.vmem %s3, %s285
        %s287 = smul.u32 2, %s26
        %s288 = smul.u32 2, %s26
        %v289 = vld [vmem:[#allocation2] sm:$0xff]
        %v290 = vld [vmem:[#allocation2 + $0x8] sm:$0xff]
        %v291 = vld [vmem:[#allocation2 + $0x10] sm:$0xff]
        %v292 = vld [vmem:[#allocation2 + $0x18] sm:$0xff]
        %v293 = vld [vmem:[#allocation2 + $0x20] sm:$0xff]
        %v294 = vld [vmem:[#allocation2 + $0x28] sm:$0xff]
        %v295 = vld [vmem:[#allocation2 + $0x30] sm:$0xff]
        %v296 = vld [vmem:[#allocation2 + $0x38] sm:$0xff]
        %v297 = vld [vmem:[%s243] sm:$0xff]
        %v298 = vld [vmem:[%s243 + $0x8] sm:$0xff]
        %v299 = vld [vmem:[%s243 + $0x10] sm:$0xff]
        %v300 = vld [vmem:[%s243 + $0x18] sm:$0xff]
        %v301 = vld [vmem:[%s243 + $0x20] sm:$0xff]
        %v302 = vld [vmem:[%s243 + $0x28] sm:$0xff]
        %v303 = vld [vmem:[%s243 + $0x30] sm:$0xff]
        %v304 = vld [vmem:[%s243 + $0x38] sm:$0xff]
        %v305 = vld [vmem:[%s243 + $0x40] sm:$0xff]
        %v306 = vld [vmem:[%s243 + $0x48] sm:$0xff]
        %v307 = vld [vmem:[%s243 + $0x50] sm:$0xff]
        %v308 = vld [vmem:[%s243 + $0x58] sm:$0xff]
        %v309 = vld [vmem:[%s243 + $0x60] sm:$0xff]
        %v310 = vld [vmem:[%s243 + $0x68] sm:$0xff]
        %v311 = vld [vmem:[%s243 + $0x70] sm:$0xff]
        %v312 = vld [vmem:[%s243 + $0x78] sm:$0xff]
        %v313 = vld [vmem:[%s243 + $0x80] sm:$0xff]
        %v314 = vld [vmem:[%s243 + $0x88] sm:$0xff]
        %v315 = vld [vmem:[%s243 + $0x90] sm:$0xff]
        %v316 = vld [vmem:[%s243 + $0x98] sm:$0xff]
        %v317 = vld [vmem:[%s243 + $0xa0] sm:$0xff]
        %v318 = vld [vmem:[%s243 + $0xa8] sm:$0xff]
        %v319 = vld [vmem:[%s243 + $0xb0] sm:$0xff]
        %v320 = vld [vmem:[%s243 + $0xb8] sm:$0xff]
        %v321 = vld [vmem:[%s243 + $0xc0] sm:$0xff]
        %v322 = vld [vmem:[%s243 + $0xc8] sm:$0xff]
        %v323 = vld [vmem:[%s243 + $0xd0] sm:$0xff]
        %v324 = vld [vmem:[%s243 + $0xd8] sm:$0xff]
        %v325 = vld [vmem:[%s243 + $0xe0] sm:$0xff]
        %v326 = vld [vmem:[%s243 + $0xe8] sm:$0xff]
        %v327 = vld [vmem:[%s243 + $0xf0] sm:$0xff]
        %v328 = vld [vmem:[%s243 + $0xf8] sm:$0xff]
        %v337 = vunpack.c.l.b16 %v289
        %v338 = vunpack.c.h.b16 %v289
        %v339 = vunpack.c.l.b16 %v290
        %v340 = vunpack.c.h.b16 %v290
        %v341 = vunpack.c.l.b16 %v291
        %v342 = vunpack.c.h.b16 %v291
        %v343 = vunpack.c.l.b16 %v292
        %v344 = vunpack.c.h.b16 %v292
        %v345 = vunpack.c.l.b16 %v293
        %v346 = vunpack.c.h.b16 %v293
        %v347 = vunpack.c.l.b16 %v294
        %v348 = vunpack.c.h.b16 %v294
        %v349 = vunpack.c.l.b16 %v295
        %v350 = vunpack.c.h.b16 %v295
        %v351 = vunpack.c.l.b16 %v296
        %v352 = vunpack.c.h.b16 %v296
        %v353 = vpack.c.b16 %v339, %v337
        %v354 = vpack.c.b16 %v340, %v338
        %v355 = vpack.c.b16 %v343, %v341
        %v356 = vpack.c.b16 %v344, %v342
        %v357 = vpack.c.b16 %v347, %v345
        %v358 = vpack.c.b16 %v348, %v346
        %v359 = vpack.c.b16 %v351, %v349
        %v360 = vpack.c.b16 %v352, %v350
        %v401 = vunpack.c.l.b16 %v297
        %v402 = vunpack.c.h.b16 %v297
        %v403 = vunpack.c.l.b16 %v298
        %v404 = vunpack.c.h.b16 %v298
        %v405 = vunpack.c.l.b16 %v299
        %v406 = vunpack.c.h.b16 %v299
        %v407 = vunpack.c.l.b16 %v300
        %v408 = vunpack.c.h.b16 %v300
        %v409 = vunpack.c.l.b16 %v301
        %v410 = vunpack.c.h.b16 %v301
        %v411 = vunpack.c.l.b16 %v302
        %v412 = vunpack.c.h.b16 %v302
        %v413 = vunpack.c.l.b16 %v303
        %v414 = vunpack.c.h.b16 %v303
        %v415 = vunpack.c.l.b16 %v304
        %v416 = vunpack.c.h.b16 %v304
        %v417 = vunpack.c.l.b16 %v305
        %v418 = vunpack.c.h.b16 %v305
        %v419 = vunpack.c.l.b16 %v306
        %v420 = vunpack.c.h.b16 %v306
        %v421 = vunpack.c.l.b16 %v307
        %v422 = vunpack.c.h.b16 %v307
        %v423 = vunpack.c.l.b16 %v308
        %v424 = vunpack.c.h.b16 %v308
        %v425 = vunpack.c.l.b16 %v309
        %v426 = vunpack.c.h.b16 %v309
        %v427 = vunpack.c.l.b16 %v310
        %v428 = vunpack.c.h.b16 %v310
        %v429 = vunpack.c.l.b16 %v311
        %v430 = vunpack.c.h.b16 %v311
        %v431 = vunpack.c.l.b16 %v312
        %v432 = vunpack.c.h.b16 %v312
        %v433 = vunpack.c.l.b16 %v313
        %v434 = vunpack.c.h.b16 %v313
        %v435 = vunpack.c.l.b16 %v314
        %v436 = vunpack.c.h.b16 %v314
        %v437 = vunpack.c.l.b16 %v315
        %v438 = vunpack.c.h.b16 %v315
        %v439 = vunpack.c.l.b16 %v316
        %v440 = vunpack.c.h.b16 %v316
        %v441 = vunpack.c.l.b16 %v317
        %v442 = vunpack.c.h.b16 %v317
        %v443 = vunpack.c.l.b16 %v318
        %v444 = vunpack.c.h.b16 %v318
        %v445 = vunpack.c.l.b16 %v319
        %v446 = vunpack.c.h.b16 %v319
        %v447 = vunpack.c.l.b16 %v320
        %v448 = vunpack.c.h.b16 %v320
        %v449 = vunpack.c.l.b16 %v321
        %v450 = vunpack.c.h.b16 %v321
        %v451 = vunpack.c.l.b16 %v322
        %v452 = vunpack.c.h.b16 %v322
        %v453 = vunpack.c.l.b16 %v323
        %v454 = vunpack.c.h.b16 %v323
        %v455 = vunpack.c.l.b16 %v324
        %v456 = vunpack.c.h.b16 %v324
        %v457 = vunpack.c.l.b16 %v325
        %v458 = vunpack.c.h.b16 %v325
        %v459 = vunpack.c.l.b16 %v326
        %v460 = vunpack.c.h.b16 %v326
        %v461 = vunpack.c.l.b16 %v327
        %v462 = vunpack.c.h.b16 %v327
        %v463 = vunpack.c.l.b16 %v328
        %v464 = vunpack.c.h.b16 %v328
        %v465 = vpack.c.b16 %v403, %v401
        %v466 = vpack.c.b16 %v404, %v402
        %v467 = vpack.c.b16 %v407, %v405
        %v468 = vpack.c.b16 %v408, %v406
        %v469 = vpack.c.b16 %v411, %v409
        %v470 = vpack.c.b16 %v412, %v410
        %v471 = vpack.c.b16 %v415, %v413
        %v472 = vpack.c.b16 %v416, %v414
        %v473 = vpack.c.b16 %v419, %v417
        %v474 = vpack.c.b16 %v420, %v418
        %v475 = vpack.c.b16 %v423, %v421
        %v476 = vpack.c.b16 %v424, %v422
        %v477 = vpack.c.b16 %v427, %v425
        %v478 = vpack.c.b16 %v428, %v426
        %v479 = vpack.c.b16 %v431, %v429
        %v480 = vpack.c.b16 %v432, %v430
        %v481 = vpack.c.b16 %v435, %v433
        %v482 = vpack.c.b16 %v436, %v434
        %v483 = vpack.c.b16 %v439, %v437
        %v484 = vpack.c.b16 %v440, %v438
        %v485 = vpack.c.b16 %v443, %v441
        %v486 = vpack.c.b16 %v444, %v442
        %v487 = vpack.c.b16 %v447, %v445
        %v488 = vpack.c.b16 %v448, %v446
        %v489 = vpack.c.b16 %v451, %v449
        %v490 = vpack.c.b16 %v452, %v450
        %v491 = vpack.c.b16 %v455, %v453
        %v492 = vpack.c.b16 %v456, %v454
        %v493 = vpack.c.b16 %v459, %v457
        %v494 = vpack.c.b16 %v460, %v458
        %v495 = vpack.c.b16 %v463, %v461
        %v496 = vpack.c.b16 %v464, %v462
        %529 = vmatprep.subr.bf16.mxu0 %v466
        %530 = vmatpush1.bf16.msra.mxu0 %v465
        %531 = vmatprep.subr.bf16.mxu0 %v468
        %532 = vmatpush1.bf16.msra.mxu0 %v467
        %533 = vmatprep.subr.bf16.mxu0 %v470
        %534 = vmatpush1.bf16.msra.mxu0 %v469
        %535 = vmatprep.subr.bf16.mxu0 %v472
        %536 = vmatpush1.bf16.msra.mxu0 %v471
        %537 = vmatprep.subr.bf16.mxu0 %v474
        %538 = vmatpush1.bf16.msra.mxu0 %v473
        %539 = vmatprep.subr.bf16.mxu0 %v476
        %540 = vmatpush1.bf16.msra.mxu0 %v475
        %541 = vmatprep.subr.bf16.mxu0 %v478
        %542 = vmatpush1.bf16.msra.mxu0 %v477
        %543 = vmatprep.subr.bf16.mxu0 %v480
        %544 = vmatpush1.bf16.msra.mxu0 %v479
        %545 = vmatprep.subr.bf16.mxu0 %v482
        %546 = vmatpush1.bf16.msra.mxu0 %v481
        %547 = vmatprep.subr.bf16.mxu0 %v484
        %548 = vmatpush1.bf16.msra.mxu0 %v483
        %549 = vmatprep.subr.bf16.mxu0 %v486
        %550 = vmatpush1.bf16.msra.mxu0 %v485
        %551 = vmatprep.subr.bf16.mxu0 %v488
        %552 = vmatpush1.bf16.msra.mxu0 %v487
        %553 = vmatprep.subr.bf16.mxu0 %v490
        %554 = vmatpush1.bf16.msra.mxu0 %v489
        %555 = vmatprep.subr.bf16.mxu0 %v492
        %556 = vmatpush1.bf16.msra.mxu0 %v491
        %557 = vmatprep.subr.bf16.mxu0 %v494
        %558 = vmatpush1.bf16.msra.mxu0 %v493
        %559 = vmatprep.subr.bf16.mxu0 %v496
        %560 = vmatpush1.bf16.msra.mxu0 %v495
        %561 = vmatprep.mubr.bf16.mxu0 %v354
        %562 = vmatmul.mubr.bf16.gmra.mrb[0].mxu0 %v353
        %v563 = vpop.f32.mrb[0].mxu0
        %v564 = vadd.f32 0.0, %v563
        %v565 = vpop.f32.mrb[0].mxu0
        %v566 = vadd.f32 0.0, %v565
        %v567 = vpop.f32.mrb[0].mxu0
        %v568 = vadd.f32 0.0, %v567
        %v569 = vpop.f32.mrb[0].mxu0
        %v570 = vadd.f32 0.0, %v569
        %571 = vmatprep.mubr.bf16.mxu0 %v356
        %572 = vmatmul.mubr.bf16.gmra.mrb[0].mxu0 %v355
        %v573 = vpop.f32.mrb[0].mxu0
        %v574 = vadd.f32 0.0, %v573
        %v575 = vpop.f32.mrb[0].mxu0
        %v576 = vadd.f32 0.0, %v575
        %v577 = vpop.f32.mrb[0].mxu0
        %v578 = vadd.f32 0.0, %v577
        %v579 = vpop.f32.mrb[0].mxu0
        %v580 = vadd.f32 0.0, %v579
        %581 = vmatprep.mubr.bf16.mxu0 %v358
        %582 = vmatmul.mubr.bf16.gmra.mrb[0].mxu0 %v357
        %v583 = vpop.f32.mrb[0].mxu0
        %v584 = vadd.f32 0.0, %v583
        %v585 = vpop.f32.mrb[0].mxu0
        %v586 = vadd.f32 0.0, %v585
        %v587 = vpop.f32.mrb[0].mxu0
        %v588 = vadd.f32 0.0, %v587
        %v589 = vpop.f32.mrb[0].mxu0
        %v590 = vadd.f32 0.0, %v589
        %591 = vmatprep.mubr.bf16.mxu0 %v360
        %592 = vmatmul.mubr.bf16.gmra.mrb[0].mxu0 %v359
        %v593 = vpop.f32.mrb[0].mxu0
        %v594 = vadd.f32 0.0, %v593
        %v595 = vpop.f32.mrb[0].mxu0
        %v596 = vadd.f32 0.0, %v595
        %v597 = vpop.f32.mrb[0].mxu0
        %v598 = vadd.f32 0.0, %v597
        %v599 = vpop.f32.mrb[0].mxu0
        %v600 = vadd.f32 0.0, %v599
        %601 = vdwg.mxu0
        %p602 = scmp.eq.s32.totalorder %s27, 0
        // Predicated region
        $region45: #{tpu_custom_call.1} parent=35 // pred_check
          %p603 = pneg %p602
        $region46: #{tpu_custom_call.1} parent=35 // pred_check_branch
          %605 = sbr.rel (%p603) target = $region48
        $region47: #{tpu_custom_call.1} parent=35 // pred_region
          %606 = vst [vmem:[%s275] sm:$0xff] %v564
          %607 = vst [vmem:[%s275 + $0x8] sm:$0xff] %v566
          %608 = vst [vmem:[%s275 + $0x10] sm:$0xff] %v568
          %609 = vst [vmem:[%s275 + $0x18] sm:$0xff] %v570
          %610 = vst [vmem:[%s275 + $0x20] sm:$0xff] %v574
          %611 = vst [vmem:[%s275 + $0x28] sm:$0xff] %v576
          %612 = vst [vmem:[%s275 + $0x30] sm:$0xff] %v578
          %613 = vst [vmem:[%s275 + $0x38] sm:$0xff] %v580
          %614 = vst [vmem:[%s275 + $0x40] sm:$0xff] %v584
          %615 = vst [vmem:[%s275 + $0x48] sm:$0xff] %v586
          %616 = vst [vmem:[%s275 + $0x50] sm:$0xff] %v588
          %617 = vst [vmem:[%s275 + $0x58] sm:$0xff] %v590
          %618 = vst [vmem:[%s275 + $0x60] sm:$0xff] %v594
          %619 = vst [vmem:[%s275 + $0x68] sm:$0xff] %v596
          %620 = vst [vmem:[%s275 + $0x70] sm:$0xff] %v598
          %621 = vst [vmem:[%s275 + $0x78] sm:$0xff] %v600
        $region48: #{tpu_custom_call.1} parent=35 // pred_fallthru
          _
        %p622 = scmp.gt.s32.totalorder %s27, 0
        // Predicated region
        $region49: #{tpu_custom_call.1} parent=35 // pred_check
          %p623 = pneg %p622
        $region50: #{tpu_custom_call.1} parent=35 // pred_check_branch
          %625 = sbr.rel (%p623) target = $region52
        $region51: #{tpu_custom_call.1} parent=35 // pred_region
          %v626 = vld [vmem:[%s275] sm:$0xff]
          %v627 = vld [vmem:[%s275 + $0x8] sm:$0xff]
          %v628 = vld [vmem:[%s275 + $0x10] sm:$0xff]
          %v629 = vld [vmem:[%s275 + $0x18] sm:$0xff]
          %v630 = vld [vmem:[%s275 + $0x20] sm:$0xff]
          %v631 = vld [vmem:[%s275 + $0x28] sm:$0xff]
          %v632 = vld [vmem:[%s275 + $0x30] sm:$0xff]
          %v633 = vld [vmem:[%s275 + $0x38] sm:$0xff]
          %v634 = vld [vmem:[%s275 + $0x40] sm:$0xff]
          %v635 = vld [vmem:[%s275 + $0x48] sm:$0xff]
          %v636 = vld [vmem:[%s275 + $0x50] sm:$0xff]
          %v637 = vld [vmem:[%s275 + $0x58] sm:$0xff]
          %v638 = vld [vmem:[%s275 + $0x60] sm:$0xff]
          %v639 = vld [vmem:[%s275 + $0x68] sm:$0xff]
          %v640 = vld [vmem:[%s275 + $0x70] sm:$0xff]
          %v641 = vld [vmem:[%s275 + $0x78] sm:$0xff]
          %v642 = vadd.f32 %v626, %v564
          %v643 = vadd.f32 %v627, %v566
          %v644 = vadd.f32 %v628, %v568
          %v645 = vadd.f32 %v629, %v570
          %v646 = vadd.f32 %v630, %v574
          %v647 = vadd.f32 %v631, %v576
          %v648 = vadd.f32 %v632, %v578
          %v649 = vadd.f32 %v633, %v580
          %v650 = vadd.f32 %v634, %v584
          %v651 = vadd.f32 %v635, %v586
          %v652 = vadd.f32 %v636, %v588
          %v653 = vadd.f32 %v637, %v590
          %v654 = vadd.f32 %v638, %v594
          %v655 = vadd.f32 %v639, %v596
          %v656 = vadd.f32 %v640, %v598
          %v657 = vadd.f32 %v641, %v600
          %658 = vst [vmem:[%s275] sm:$0xff] %v642
          %659 = vst [vmem:[%s275 + $0x8] sm:$0xff] %v643
          %660 = vst [vmem:[%s275 + $0x10] sm:$0xff] %v644
          %661 = vst [vmem:[%s275 + $0x18] sm:$0xff] %v645
          %662 = vst [vmem:[%s275 + $0x20] sm:$0xff] %v646
          %663 = vst [vmem:[%s275 + $0x28] sm:$0xff] %v647
          %664 = vst [vmem:[%s275 + $0x30] sm:$0xff] %v648
          %665 = vst [vmem:[%s275 + $0x38] sm:$0xff] %v649
          %666 = vst [vmem:[%s275 + $0x40] sm:$0xff] %v650
          %667 = vst [vmem:[%s275 + $0x48] sm:$0xff] %v651
          %668 = vst [vmem:[%s275 + $0x50] sm:$0xff] %v652
          %669 = vst [vmem:[%s275 + $0x58] sm:$0xff] %v653
          %670 = vst [vmem:[%s275 + $0x60] sm:$0xff] %v654
          %671 = vst [vmem:[%s275 + $0x68] sm:$0xff] %v655
          %672 = vst [vmem:[%s275 + $0x70] sm:$0xff] %v656
          %673 = vst [vmem:[%s275 + $0x78] sm:$0xff] %v657
        $region52: #{tpu_custom_call.1} parent=35 // pred_fallthru
          _
        // Predicated region
        $region53: #{tpu_custom_call.1} parent=35 // pred_check
          %p674 = pneg %p602
        $region54: #{tpu_custom_call.1} parent=35 // pred_check_branch
          %676 = sbr.rel (%p674) target = $region56
        $region55: #{tpu_custom_call.1} parent=35 // pred_region
          %v677 = vld [vmem:[%s275] sm:$0xff]
          %v678 = vld [vmem:[%s275 + $0x8] sm:$0xff]
          %v679 = vld [vmem:[%s275 + $0x10] sm:$0xff]
          %v680 = vld [vmem:[%s275 + $0x18] sm:$0xff]
          %v681 = vld [vmem:[%s275 + $0x20] sm:$0xff]
          %v682 = vld [vmem:[%s275 + $0x28] sm:$0xff]
          %v683 = vld [vmem:[%s275 + $0x30] sm:$0xff]
          %v684 = vld [vmem:[%s275 + $0x38] sm:$0xff]
          %v685 = vld [vmem:[%s275 + $0x40] sm:$0xff]
          %v686 = vld [vmem:[%s275 + $0x48] sm:$0xff]
          %v687 = vld [vmem:[%s275 + $0x50] sm:$0xff]
          %v688 = vld [vmem:[%s275 + $0x58] sm:$0xff]
          %v689 = vld [vmem:[%s275 + $0x60] sm:$0xff]
          %v690 = vld [vmem:[%s275 + $0x68] sm:$0xff]
          %v691 = vld [vmem:[%s275 + $0x70] sm:$0xff]
          %v692 = vld [vmem:[%s275 + $0x78] sm:$0xff]
          %v693 = vadd.f32 %v677, %v679
          %v694 = vadd.f32 %v693, %v681
          %v695 = vadd.f32 %v694, %v683
          %v696 = vadd.f32 %v695, %v685
          %v697 = vadd.f32 %v696, %v687
          %v698 = vadd.f32 %v697, %v689
          %v699 = vadd.f32 %v698, %v691
          %v700 = vrot.slane %v699, 4
          %v701 = vadd.f32 %v699, %v700
          %v702 = vrot.slane %v701, 2
          %v703 = vadd.f32 %v701, %v702
          %v704 = vrot.slane %v703, 1
          %v705 = vadd.f32 %v703, %v704
          %v706 = vadd.f32 %v678, %v680
          %v707 = vadd.f32 %v706, %v682
          %v708 = vadd.f32 %v707, %v684
          %v709 = vadd.f32 %v708, %v686
          %v710 = vadd.f32 %v709, %v688
          %v711 = vadd.f32 %v710, %v690
          %v712 = vadd.f32 %v711, %v692
          %v713 = vrot.slane %v712, 4
          %v714 = vadd.f32 %v712, %v713
          %v715 = vrot.slane %v714, 2
          %v716 = vadd.f32 %v714, %v715
          %v717 = vrot.slane %v716, 1
          %v718 = vadd.f32 %v716, %v717
          %v719 = vrcp.pop 64.0
          %v720 = vmul.f32 %v705, %v719
          %v721 = vmul.f32 %v718, %v719
          %v722 = vmul.f32 %v677, %v677
          %v723 = vmul.f32 %v678, %v678
          %v724 = vmul.f32 %v679, %v679
          %v725 = vmul.f32 %v680, %v680
          %v726 = vmul.f32 %v681, %v681
          %v727 = vmul.f32 %v682, %v682
          %v728 = vmul.f32 %v683, %v683
          %v729 = vmul.f32 %v684, %v684
          %v730 = vmul.f32 %v685, %v685
          %v731 = vmul.f32 %v686, %v686
          %v732 = vmul.f32 %v687, %v687
          %v733 = vmul.f32 %v688, %v688
          %v734 = vmul.f32 %v689, %v689
          %v735 = vmul.f32 %v690, %v690
          %v736 = vmul.f32 %v691, %v691
          %v737 = vmul.f32 %v692, %v692
          %v738 = vadd.f32 %v722, %v724
          %v739 = vadd.f32 %v738, %v726
          %v740 = vadd.f32 %v739, %v728
          %v741 = vadd.f32 %v740, %v730
          %v742 = vadd.f32 %v741, %v732
          %v743 = vadd.f32 %v742, %v734
          %v744 = vadd.f32 %v743, %v736
          %v745 = vrot.slane %v744, 4
          %v746 = vadd.f32 %v744, %v745
          %v747 = vrot.slane %v746, 2
          %v748 = vadd.f32 %v746, %v747
          %v749 = vrot.slane %v748, 1
          %v750 = vadd.f32 %v748, %v749
          %v751 = vadd.f32 %v723, %v725
          %v752 = vadd.f32 %v751, %v727
          %v753 = vadd.f32 %v752, %v729
          %v754 = vadd.f32 %v753, %v731
          %v755 = vadd.f32 %v754, %v733
          %v756 = vadd.f32 %v755, %v735
          %v757 = vadd.f32 %v756, %v737
          %v758 = vrot.slane %v757, 4
          %v759 = vadd.f32 %v757, %v758
          %v760 = vrot.slane %v759, 2
          %v761 = vadd.f32 %v759, %v760
          %v762 = vrot.slane %v761, 1
          %v763 = vadd.f32 %v761, %v762
          %v764 = vmul.f32 %v750, %v719
          %v765 = vmul.f32 %v763, %v719
          %v766 = vmul.f32 %v720, %v720
          %v767 = vmul.f32 %v721, %v721
          %v768 = vsub.f32 %v764, %v766
          %v769 = vsub.f32 %v765, %v767
          %v770 = vmax.f32 %v768, 0.0
          %v771 = vmax.f32 %v769, 0.0
          %v772 = vld [vmem:[%s281] sm:$0x3]
          %v773 = vadd.f32 %v770, 1e-05
          %v774 = vadd.f32 %v771, 1e-05
          %v775 = vrsqrt.pop %v773
          %v776 = vrsqrt.pop %v774
          %v779 = vcombine.low %v775, %v776
          %v781 = vunpack.c.l.s4 1966171168
          %v782 = vunpack.c.0.s8 %v781
          %v783 = vlaneseq
          %v784 = vshrl.u32 %v783, 7
          %v785 = vsub.s32 %v782, %v784
          %v786 = vrot.slane %v779, %v785
          %v788 = vunpack.c.l.s4 1966171168
          %v789 = vunpack.c.0.s8 %v788
          %v790 = vlaneseq
          %v791 = vshrl.u32 %v790, 7
          %v792 = vsub.s32 %v789, %v791
          %v793 = vrot.slane %v786, %v792
          %v795 = vmul.f32 %v772, %v793
          %v796 = vld [vmem:[%s286] sm:$0x3]
          %v799 = vcombine.low %v720, %v721
          %v801 = vunpack.c.l.s4 1966171168
          %v802 = vunpack.c.0.s8 %v801
          %v803 = vlaneseq
          %v804 = vshrl.u32 %v803, 7
          %v805 = vsub.s32 %v802, %v804
          %v806 = vrot.slane %v799, %v805
          %v808 = vunpack.c.l.s4 1966171168
          %v809 = vunpack.c.0.s8 %v808
          %v810 = vlaneseq
          %v811 = vshrl.u32 %v810, 7
          %v812 = vsub.s32 %v809, %v811
          %v813 = vrot.slane %v806, %v812
          %v815 = vmul.f32 %v795, %v813
          %v816 = vsub.f32 %v796, %v815
          %v818 = vlaneseq
          %v819 = vshrl.u32 %v818, 7
          %v820 = vsub.s32 0, %v819
          %v821 = vrot.slane %v795, %v820
          %v822 = vlaneseq
          %v823 = vshrl.u32 %v822, 7
          %v824 = vsub.s32 1, %v823
          %v825 = vrot.slane %v795, %v824
          %v828 = vmul.f32 %v677, %v821
          %v829 = vmul.f32 %v678, %v825
          %v830 = vmul.f32 %v679, %v821
          %v831 = vmul.f32 %v680, %v825
          %v832 = vmul.f32 %v681, %v821
          %v833 = vmul.f32 %v682, %v825
          %v834 = vmul.f32 %v683, %v821
          %v835 = vmul.f32 %v684, %v825
          %v836 = vmul.f32 %v685, %v821
          %v837 = vmul.f32 %v686, %v825
          %v838 = vmul.f32 %v687, %v821
          %v839 = vmul.f32 %v688, %v825
          %v840 = vmul.f32 %v689, %v821
          %v841 = vmul.f32 %v690, %v825
          %v842 = vmul.f32 %v691, %v821
          %v843 = vmul.f32 %v692, %v825
          %v845 = vlaneseq
          %v846 = vshrl.u32 %v845, 7
          %v847 = vsub.s32 0, %v846
          %v848 = vrot.slane %v816, %v847
          %v849 = vlaneseq
          %v850 = vshrl.u32 %v849, 7
          %v851 = vsub.s32 1, %v850
          %v852 = vrot.slane %v816, %v851
          %v855 = vadd.f32 %v828, %v848
          %v856 = vadd.f32 %v829, %v852
          %v857 = vadd.f32 %v830, %v848
          %v858 = vadd.f32 %v831, %v852
          %v859 = vadd.f32 %v832, %v848
          %v860 = vadd.f32 %v833, %v852
          %v861 = vadd.f32 %v834, %v848
          %v862 = vadd.f32 %v835, %v852
          %v863 = vadd.f32 %v836, %v848
          %v864 = vadd.f32 %v837, %v852
          %v865 = vadd.f32 %v838, %v848
          %v866 = vadd.f32 %v839, %v852
          %v867 = vadd.f32 %v840, %v848
          %v868 = vadd.f32 %v841, %v852
          %v869 = vadd.f32 %v842, %v848
          %v870 = vadd.f32 %v843, %v852
          %v871 = vmul.f32 %v855, 0.2
          %v872 = vmul.f32 %v856, 0.2
          %v873 = vmul.f32 %v857, 0.2
          %v874 = vmul.f32 %v858, 0.2
          %v875 = vmul.f32 %v859, 0.2
          %v876 = vmul.f32 %v860, 0.2
          %v877 = vmul.f32 %v861, 0.2
          %v878 = vmul.f32 %v862, 0.2
          %v879 = vmul.f32 %v863, 0.2
          %v880 = vmul.f32 %v864, 0.2
          %v881 = vmul.f32 %v865, 0.2
          %v882 = vmul.f32 %v866, 0.2
          %v883 = vmul.f32 %v867, 0.2
          %v884 = vmul.f32 %v868, 0.2
          %v885 = vmul.f32 %v869, 0.2
          %v886 = vmul.f32 %v870, 0.2
          %v887 = vmax.f32 %v855, %v871
          %v888 = vmax.f32 %v856, %v872
          %v889 = vmax.f32 %v857, %v873
          %v890 = vmax.f32 %v858, %v874
          %v891 = vmax.f32 %v859, %v875
          %v892 = vmax.f32 %v860, %v876
          %v893 = vmax.f32 %v861, %v877
          %v894 = vmax.f32 %v862, %v878
          %v895 = vmax.f32 %v863, %v879
          %v896 = vmax.f32 %v864, %v880
          %v897 = vmax.f32 %v865, %v881
          %v898 = vmax.f32 %v866, %v882
          %v899 = vmax.f32 %v867, %v883
          %v900 = vmax.f32 %v868, %v884
          %v901 = vmax.f32 %v869, %v885
          %v902 = vmax.f32 %v870, %v886
          %903 = vst [vmem:[%s275] sm:$0xff] %v887
          %904 = vst [vmem:[%s275 + $0x8] sm:$0xff] %v888
          %905 = vst [vmem:[%s275 + $0x10] sm:$0xff] %v889
          %906 = vst [vmem:[%s275 + $0x18] sm:$0xff] %v890
          %907 = vst [vmem:[%s275 + $0x20] sm:$0xff] %v891
          %908 = vst [vmem:[%s275 + $0x28] sm:$0xff] %v892
          %909 = vst [vmem:[%s275 + $0x30] sm:$0xff] %v893
          %910 = vst [vmem:[%s275 + $0x38] sm:$0xff] %v894
          %911 = vst [vmem:[%s275 + $0x40] sm:$0xff] %v895
          %912 = vst [vmem:[%s275 + $0x48] sm:$0xff] %v896
          %913 = vst [vmem:[%s275 + $0x50] sm:$0xff] %v897
          %914 = vst [vmem:[%s275 + $0x58] sm:$0xff] %v898
          %915 = vst [vmem:[%s275 + $0x60] sm:$0xff] %v899
          %916 = vst [vmem:[%s275 + $0x68] sm:$0xff] %v900
          %917 = vst [vmem:[%s275 + $0x70] sm:$0xff] %v901
          %918 = vst [vmem:[%s275 + $0x78] sm:$0xff] %v902
        $region56: #{tpu_custom_call.1} parent=35 // pred_fallthru
          _
        %s919 = sand.u32 %s143, 1
        %s920 = scalar_lea.sflag [#allocation4], %s919
        %s921 = sand.u32 %s143, 1
        %s922 = smul.addr %s921, 128
        %s923 = scalar_lea.vmem [#allocation7], %s922
        // Predicated region
        $region57: #{tpu_custom_call.1} parent=35 // pred_check
          %p924 = pneg %p153
        $region58: #{tpu_custom_call.1} parent=35 // pred_check_branch
          %926 = sbr.rel (%p924) target = $region60
        $region59: #{tpu_custom_call.1} parent=35 // pred_region
          %s927 = smul.u32 2, %s26
          %s929 = ssub.s32 2048, 2048
          %930 = vsyncadd %s920, %s929
          %s931 = smul.addr %s927, 128
          %s932 = scalar_lea.hbm %s4, %s931
          %s933 = sshll.u32 %s923, 4
          %s934 = int_to_ptr.vmem [resolvable:$true] %s933
          %939 = dma.vmem_to_hbm [thread:$0]  %s934, 2048, %s932, %s920, 256, 512, 16
        $region60: #{tpu_custom_call.1} parent=35 // pred_fallthru
          _
      $region36: #{tpu_custom_call.1} parent=5 // pred_fallthru
        _
      %p940 = scmp.le.s32.totalorder 2, %s17
      // Predicated region
      $region61: #{tpu_custom_call.1} parent=5 // pred_check
        %p941 = pneg %p940
      $region62: #{tpu_custom_call.1} parent=5 // pred_check_branch
        %943 = sbr.rel (%p941) target = $region64
      $region63: #{tpu_custom_call.1} parent=5 // pred_region
        %s944 = ssub.s32 %s17, 2
        // Predicated region
        $region65: #{tpu_custom_call.1} parent=63 // pred_check
          %p945 = pneg %p159
        $region66: #{tpu_custom_call.1} parent=63 // pred_check_branch
          %947 = sbr.rel (%p945) target = $region68
        $region67: #{tpu_custom_call.1} parent=63 // pred_region
          %s948 = sand.u32 %s144, 1
          %s949 = scalar_lea.sflag [#allocation4], %s948
          %s950 = sand.u32 %s144, 1
          %s951 = smul.addr %s950, 128
          %s952 = scalar_lea.vmem [#allocation7], %s951
          %953 = dma.done %s949, 2048
        $region68: #{tpu_custom_call.1} parent=63 // pred_fallthru
          _
      $region64: #{tpu_custom_call.1} parent=5 // pred_fallthru
        _
    $region6: #{tpu_custom_call.1} parent=1 // loop_footer
      %s21 = sadd.s32 1, %s17
    $region7: #{tpu_custom_call.1} parent=1 // loop_footer_branch
      %16 = sbr.rel target = $region3
    $region8: #{tpu_custom_call.1} parent=1 // loop_exit
      _
    %954 = vsyncpa [#allocation3], 1
    %s955 = scalar_lea.sflag [#allocation3], 1
    %956 = vsyncpa %s955, 1
    %957 = vsyncpa [#allocation6], 1
    %s958 = scalar_lea.sflag [#allocation6], 1
    %959 = vsyncpa %s958, 1
    %960 = vsyncpa [#allocation4], 1
    %s961 = scalar_lea.sflag [#allocation4], 1
    %962 = vsyncpa %s961, 1

</llo_original>
